<compile_context>
chip_gen: v6e
topology: v6e:2x2x1
jax: 0.10.0
libtpu: 0.0.40
codegen_flags: <defaults>
</compile_context>

<pallas_src>
import functools

import jax
import jax.numpy as jnp
from jax import lax
from jax.experimental import pallas as pl
from jax.experimental.pallas import tpu as pltpu

NUM_INPUTS = 1
NUM_ACTIONS = 10
HIDDEN = 128
HEAD_W = 128        # fused head width (lane-dense): lanes 0..9 logits, lane 10 value
MAX_TN = 1024       # max rows per grid step (keeps >=2 steps for big batches)


def _round_up(x, m):
    return ((x + m - 1) // m) * m


def _mfmaac_kernel(x_ref, w1_ref, b1_ref, wh_ref, bh_ref, out_ref):
    # x: (TN, 1) f32
    x = x_ref[...]

    # affine (in_features = 1) as a VPU broadcast multiply-add + ReLU -> (TN, 128)
    h = jnp.maximum(x * w1_ref[...] + b1_ref[...], 0.0)

    # fused action+value head: one lane-dense MXU matmul -> (TN, 128)
    head = jnp.dot(h, wh_ref[...], preferred_element_type=jnp.float32) + bh_ref[...]

    # softmax over the action lanes only (mask lane >= NUM_ACTIONS)
    lane = lax.broadcasted_iota(jnp.int32, head.shape, dimension=1)
    is_action = lane < NUM_ACTIONS
    logits = jnp.where(is_action, head, jnp.float32(-1e30))
    m = jnp.max(logits, axis=-1, keepdims=True)
    e = jnp.exp(logits - m)
    denom = jnp.sum(e, axis=-1, keepdims=True)
    probs = e * pl.reciprocal(denom, approx=True)

    # lane-dense output slab: probs in lanes 0..9, value (head lane 10) elsewhere
    out_ref[...] = jnp.where(is_action, probs, head)


@jax.jit
def mfmaac_forward_core(x, w1, b1, wh, bh):
    """x: (N, 1) f32.  Returns (probs (N, NUM_ACTIONS), value (N, 1))."""
    n = x.shape[0]
    tn = min(MAX_TN, _round_up(n, 8))      # sublane-aligned row tile
    n_pad = _round_up(n, tn)
    x_p = jnp.pad(x, ((0, n_pad - n), (0, 0)))

    grid = (n_pad // tn,)
    bcast = lambda i: (0, 0)               # weights/biases: same block every step

    out_slab = pl.pallas_call(
        _mfmaac_kernel,
        out_shape=jax.ShapeDtypeStruct((n_pad, HEAD_W), jnp.float32),
        grid=grid,
        in_specs=[
            pl.BlockSpec((tn, NUM_INPUTS), lambda i: (i, 0)),   # x rows
            pl.BlockSpec((1, HIDDEN), bcast),                   # w1 row (1,128)
            pl.BlockSpec((1, HIDDEN), bcast),                   # b1     (1,128)
            pl.BlockSpec((HIDDEN, HEAD_W), bcast),              # fused head W (128,128)
            pl.BlockSpec((1, HEAD_W), bcast),                   # fused head b (1,128)
        ],
        out_specs=pl.BlockSpec((tn, HEAD_W), lambda i: (i, 0)),
        compiler_params=pltpu.CompilerParams(
            dimension_semantics=("parallel",)),
    )(x_p, w1, b1, wh, bh)

    probs = out_slab[:n, :NUM_ACTIONS]
    value = out_slab[:n, NUM_ACTIONS:NUM_ACTIONS + 1]
    return probs, value


def init_params(key):
    """Parameter init mirroring the module's __init__.

    Weights stored as (in_features, out_features) = torch weight transposed.
    """
    k1, k2, k3, k4 = jax.random.split(key, 4)
    # affine: Linear(1, 128) — torch default uniform(-1/sqrt(in), 1/sqrt(in))
    bound1 = 1.0 / jnp.sqrt(jnp.float32(NUM_INPUTS))
    w1 = jax.random.uniform(k1, (NUM_INPUTS, HIDDEN), jnp.float32, -bound1, bound1)
    b1 = jax.random.uniform(k2, (1, HIDDEN), jnp.float32, -bound1, bound1)
    # action_layer: Linear(128, 10) with weight/bias filled to 1/hidden_size
    wa = jnp.full((HIDDEN, NUM_ACTIONS), 1.0 / HIDDEN, jnp.float32)
    ba = jnp.full((1, NUM_ACTIONS), 1.0 / HIDDEN, jnp.float32)
    # value_layer: Linear(128, 1) — torch default init
    boundv = 1.0 / jnp.sqrt(jnp.float32(HIDDEN))
    wv = jax.random.uniform(k3, (HIDDEN, 1), jnp.float32, -boundv, boundv)
    bv = jax.random.uniform(k4, (1, 1), jnp.float32, -boundv, boundv)
    return w1, b1, wa, ba, wv, bv


def pack_head_params(wa, ba, wv, bv):
    """Fuse action + value heads into one lane-dense (HIDDEN, 128) weight."""
    wh = jnp.zeros((HIDDEN, HEAD_W), jnp.float32)
    wh = wh.at[:, :NUM_ACTIONS].set(wa).at[:, NUM_ACTIONS].set(wv[:, 0])
    bh = jnp.zeros((1, HEAD_W), jnp.float32)
    bh = bh.at[:, :NUM_ACTIONS].set(ba).at[:, NUM_ACTIONS].set(bv[:, 0])
    return wh, bh


def mfmaac_forward(deltas, params, sample_key):
    """Full forward: returns (action, action_probs, state_value, log_prob)."""
    w1, b1, wa, ba, wv, bv = params
    wh, bh = pack_head_params(wa, ba, wv, bv)
    x = deltas.reshape((-1, 1)).astype(jnp.float32)
    probs, state_value = mfmaac_forward_core(x, w1, b1, wh, bh)
    # Categorical sampling + log_prob in plain JAX on the kernel output
    # (matches torch.distributions.Categorical(probs=...) semantics).
    logp = jnp.log(probs)
    action = jax.random.categorical(sample_key, logp, axis=-1)
    log_prob = jnp.take_along_axis(logp, action[:, None], axis=-1)[:, 0]
    return action, probs, state_value, log_prob


def _reference(x, w1, b1, wa, ba, wv, bv):
    h = jnp.maximum(x @ w1 + b1, 0.0)
    value = h @ wv + bv
    logits = h @ wa + ba
    probs = jax.nn.softmax(logits, axis=-1)
    return probs, value


if __name__ == "__main__":
    key = jax.random.PRNGKey(0)
    pkey, dkey, skey = jax.random.split(key, 3)

    params = init_params(pkey)

    # state.Deltas — a small batch of scalar deltas (N = 16)
    deltas = jax.random.normal(dkey, (16,), jnp.float32)

    action, probs, state_value, log_prob = mfmaac_forward(deltas, params, skey)
    jax.block_until_ready((action, probs, state_value, log_prob))

    # sanity: shapes + softmax rows sum to 1 + match pure-JAX reference
    assert probs.shape == (16, NUM_ACTIONS)
    assert state_value.shape == (16, 1)
    assert action.shape == (16,)
    assert log_prob.shape == (16,)
    assert bool(jnp.allclose(jnp.sum(probs, axis=-1), 1.0, atol=2e-3))

    x = deltas.reshape((-1, 1)).astype(jnp.float32)
    probs_ref, value_ref = _reference(x, *params)
    assert bool(jnp.allclose(probs, probs_ref, atol=2e-3))
    assert bool(jnp.allclose(state_value, value_ref, atol=2e-3))

    print("KERNEL_OK")
</pallas_src>

<mosaic_0001>
module attributes {stable_mosaic.version = 11 : i64} {
  func.func @_mfmaac_kernel(%arg0: i32, %arg1: memref<16x1xf32, #tpu.memory_space<vmem>>, %arg2: memref<1x128xf32, #tpu.memory_space<vmem>>, %arg3: memref<1x128xf32, #tpu.memory_space<vmem>>, %arg4: memref<128x128xf32, #tpu.memory_space<vmem>>, %arg5: memref<1x128xf32, #tpu.memory_space<vmem>>, %arg6: memref<16x128xf32, #tpu.memory_space<vmem>>) attributes {dimension_semantics = [#tpu.dimension_semantics<parallel>], iteration_bounds = array<i64: 1>, scalar_prefetch = 0 : i64, scratch_operands = 0 : i64, tpu.core_type = #tpu.core_type<tc>, window_params = [{transform_indices = @transform_0, window_bounds = array<i64: 16, 1>}, {pipeline_mode = #tpu.pipeline_mode<synchronous>, transform_indices = @transform_1, window_bounds = array<i64: 1, 128>}, {pipeline_mode = #tpu.pipeline_mode<synchronous>, transform_indices = @transform_2, window_bounds = array<i64: 1, 128>}, {pipeline_mode = #tpu.pipeline_mode<synchronous>, transform_indices = @transform_3, window_bounds = array<i64: 128, 128>}, {pipeline_mode = #tpu.pipeline_mode<synchronous>, transform_indices = @transform_4, window_bounds = array<i64: 1, 128>}, {transform_indices = @transform_5, window_bounds = array<i64: 16, 128>}]} {
    %c0 = arith.constant 0 : index
    %c0_0 = arith.constant 0 : index
    %0 = vector.load %arg1[%c0, %c0_0] : memref<16x1xf32, #tpu.memory_space<vmem>>, vector<16x1xf32>
    %c0_1 = arith.constant 0 : index
    %c0_2 = arith.constant 0 : index
    %1 = vector.load %arg2[%c0_1, %c0_2] : memref<1x128xf32, #tpu.memory_space<vmem>>, vector<1x128xf32>
    %2 = vector.broadcast %0 : vector<16x1xf32> to vector<16x128xf32>
    %3 = vector.broadcast %1 : vector<1x128xf32> to vector<16x128xf32>
    %4 = arith.mulf %2, %3 : vector<16x128xf32>
    %c0_3 = arith.constant 0 : index
    %c0_4 = arith.constant 0 : index
    %5 = vector.load %arg3[%c0_3, %c0_4] : memref<1x128xf32, #tpu.memory_space<vmem>>, vector<1x128xf32>
    %6 = vector.broadcast %5 : vector<1x128xf32> to vector<16x128xf32>
    %7 = arith.addf %4, %6 : vector<16x128xf32>
    %cst = arith.constant 0.000000e+00 : f32
    %8 = vector.broadcast %cst : f32 to vector<16x128xf32>
    %9 = arith.maximumf %7, %8 : vector<16x128xf32>
    %c0_5 = arith.constant 0 : index
    %c0_6 = arith.constant 0 : index
    %10 = vector.load %arg4[%c0_5, %c0_6] : memref<128x128xf32, #tpu.memory_space<vmem>>, vector<128x128xf32>
    %cst_7 = arith.constant dense<0.000000e+00> : vector<16x128xf32>
    %11 = tpu.matmul %9, %10, %cst_7 {dimension_numbers = #tpu.dot_dimension_numbers<[1], [0], [0], [1], [0, 0, 1, 1], [], []>} : vector<16x128xf32>, vector<128x128xf32>, vector<16x128xf32> -> vector<16x128xf32>
    %c0_8 = arith.constant 0 : index
    %c0_9 = arith.constant 0 : index
    %12 = vector.load %arg5[%c0_8, %c0_9] : memref<1x128xf32, #tpu.memory_space<vmem>>, vector<1x128xf32>
    %13 = vector.broadcast %12 : vector<1x128xf32> to vector<16x128xf32>
    %14 = arith.addf %11, %13 : vector<16x128xf32>
    %15 = tpu.iota {dimensions = array<i32: 1>} : vector<16x128xi32>
    %c10_i32 = arith.constant 10 : i32
    %16 = vector.broadcast %c10_i32 : i32 to vector<16x128xi32>
    %17 = arith.cmpi slt, %15, %16 : vector<16x128xi32>
    %cst_10 = arith.constant -1.000000e+30 : f32
    %18 = vector.broadcast %cst_10 : f32 to vector<16x128xf32>
    %19 = arith.select %17, %14, %18 : vector<16x128xi1>, vector<16x128xf32>
    %cst_11 = arith.constant dense<0xFF800000> : vector<16xf32>
    %20 = vector.multi_reduction <maximumf>, %19, %cst_11 [1] : vector<16x128xf32> to vector<16xf32>
    %21 = vector.shape_cast %20 : vector<16xf32> to vector<16x1xf32>
    %22 = vector.broadcast %21 : vector<16x1xf32> to vector<16x128xf32>
    %23 = arith.subf %19, %22 : vector<16x128xf32>
    %24 = math.exp %23 : vector<16x128xf32>
    %cst_12 = arith.constant dense<0.000000e+00> : vector<16xf32>
    %25 = vector.multi_reduction <add>, %24, %cst_12 [1] : vector<16x128xf32> to vector<16xf32>
    %26 = vector.shape_cast %25 : vector<16xf32> to vector<16x1xf32>
    %27 = tpu.reciprocal %26 {approx = true} : vector<16x1xf32> -> vector<16x1xf32>
    %28 = vector.broadcast %27 : vector<16x1xf32> to vector<16x128xf32>
    %29 = arith.mulf %24, %28 : vector<16x128xf32>
    %30 = arith.select %17, %29, %14 : vector<16x128xi1>, vector<16x128xf32>
    %c0_13 = arith.constant 0 : index
    %c0_14 = arith.constant 0 : index
    %31 = vector.load %arg6[%c0_13, %c0_14] : memref<16x128xf32, #tpu.memory_space<vmem>>, vector<16x128xf32>
    tpu.vector_store %arg6[%c0_13, %c0_14], %30 {strides = array<i32>} : memref<16x128xf32, #tpu.memory_space<vmem>>, vector<16x128xf32>,
    return
  }
  func.func @transform_0(%arg0: i32) -> (i32, i32) {
    %c0_i32 = arith.constant 0 : i32
    %c0_i32_0 = arith.constant 0 : i32
    return %arg0, %c0_i32 : i32, i32
  }
  func.func @transform_1(%arg0: i32) -> (i32, i32) {
    %c0_i32 = arith.constant 0 : i32
    %c0_i32_0 = arith.constant 0 : i32
    %c0_i32_1 = arith.constant 0 : i32
    return %c0_i32, %c0_i32_0 : i32, i32
  }
  func.func @transform_2(%arg0: i32) -> (i32, i32) {
    %c0_i32 = arith.constant 0 : i32
    %c0_i32_0 = arith.constant 0 : i32
    %c0_i32_1 = arith.constant 0 : i32
    return %c0_i32, %c0_i32_0 : i32, i32
  }
  func.func @transform_3(%arg0: i32) -> (i32, i32) {
    %c0_i32 = arith.constant 0 : i32
    %c0_i32_0 = arith.constant 0 : i32
    %c0_i32_1 = arith.constant 0 : i32
    return %c0_i32, %c0_i32_0 : i32, i32
  }
  func.func @transform_4(%arg0: i32) -> (i32, i32) {
    %c0_i32 = arith.constant 0 : i32
    %c0_i32_0 = arith.constant 0 : i32
    %c0_i32_1 = arith.constant 0 : i32
    return %c0_i32, %c0_i32_0 : i32, i32
  }
  func.func @transform_5(%arg0: i32) -> (i32, i32) {
    %c0_i32 = arith.constant 0 : i32
    %c0_i32_0 = arith.constant 0 : i32
    return %arg0, %c0_i32 : i32, i32
  }
}

</mosaic_0001>

<llo_original>
// kernel: mfmaac_forward_core.1
$region0: #{mfmaac_forward_core.1}
  #allocation0 [shape = 'u32[]', space=smem, size = 0x4, offset = 0x4, fixed_abs, tag = 'smem constant byte address 0x4 - core index']
  #allocation1 [shape = 'u32[144,128]{1,0:T(1,128)}', space=vmem, size = 0x12000, scoped, tag = 'internal scratch']
  %s0 = inlined_call_operand.vmem [shape: f32[16,1], index: 0, kind: input, shape index: {}]
  %s1 = inlined_call_operand.vmem [shape: f32[1,128], index: 1, kind: input, shape index: {}]
  %s2 = inlined_call_operand.vmem [shape: f32[1,128], index: 2, kind: input, shape index: {}]
  %s3 = inlined_call_operand.hbm [shape: f32[128,128], index: 3, kind: input, shape index: {}]
  %s4 = inlined_call_operand.vmem [shape: f32[1,128], index: 4, kind: input, shape index: {}]
  %s5 = inlined_call_operand.vmem [shape: f32[16,128], index: 5, kind: output, shape index: {}]
  %s6 = sld [smem:[#allocation0]]
  $region34: #{mfmaac_forward_core.1} parent=0
    _
  %s8 = ssub.s32 1, %s6
  %s9 = scalar_select 0, %s8, %s6
  $region1: #{mfmaac_forward_core.1} parent=0
    #allocation2 [shape = 'u8[65536]{0}', space=vmem, size = 0x10000, scoped, tag = 'input window, operand 3, single buffered']
    #allocation3 [shape = 's32[1]{0}', space=sflag, size = 0x4, scoped, tag = 'scoped memory for mfmaac_forward_core.1']
    %10 = vsyncpa [#allocation3], 0
    // Predicated region
    $region2: #{mfmaac_forward_core.1} parent=1 // pred_check
      _
    $region3: #{mfmaac_forward_core.1} parent=1 // pred_check_branch
      %12 = sbr.rel (0) target = $region5
    $region4: #{mfmaac_forward_core.1} parent=1 // pred_region
      _
    $region5: #{mfmaac_forward_core.1} parent=1 // pred_fallthru
      _
    // Predicated region
    $region6: #{mfmaac_forward_core.1} parent=1 // pred_check
      _
    $region7: #{mfmaac_forward_core.1} parent=1 // pred_check_branch
      %14 = sbr.rel (0) target = $region9
    $region8: #{mfmaac_forward_core.1} parent=1 // pred_region
      _
    $region9: #{mfmaac_forward_core.1} parent=1 // pred_fallthru
      _
    // Predicated region
    $region10: #{mfmaac_forward_core.1} parent=1 // pred_check
      _
    $region11: #{mfmaac_forward_core.1} parent=1 // pred_check_branch
      %16 = sbr.rel (0) target = $region13
    $region12: #{mfmaac_forward_core.1} parent=1 // pred_region
      _
    $region13: #{mfmaac_forward_core.1} parent=1 // pred_fallthru
      _
    // Predicated region
    $region14: #{mfmaac_forward_core.1} parent=1 // pred_check
      _
    $region15: #{mfmaac_forward_core.1} parent=1 // pred_check_branch
      %18 = sbr.rel (0) target = $region17
    $region16: #{mfmaac_forward_core.1} parent=1 // pred_region
      %s20 = ssub.s32 2048, 2048
      %21 = vsyncadd [#allocation3], %s20
      %s22 = sshll.u32 [#allocation2], 4
      %s23 = int_to_ptr.vmem [resolvable:$true] %s22
      %28 = dma.hbm_to_vmem [thread:$0]  %s3, 2048, %s23, [#allocation3], 128, 128, 8
    $region17: #{mfmaac_forward_core.1} parent=1 // pred_fallthru
      _
    // Predicated region
    $region18: #{mfmaac_forward_core.1} parent=1 // pred_check
      _
    $region19: #{mfmaac_forward_core.1} parent=1 // pred_check_branch
      %30 = sbr.rel (0) target = $region21
    $region20: #{mfmaac_forward_core.1} parent=1 // pred_region
      _
    $region21: #{mfmaac_forward_core.1} parent=1 // pred_fallthru
      _
    // Predicated region
    $region22: #{mfmaac_forward_core.1} parent=1 // pred_check
      _
    $region23: #{mfmaac_forward_core.1} parent=1 // pred_check_branch
      %32 = sbr.rel (0) target = $region25
    $region24: #{mfmaac_forward_core.1} parent=1 // pred_region
      %33 = dma.done [#allocation3], 2048
    $region25: #{mfmaac_forward_core.1} parent=1 // pred_fallthru
      _
    %v34 = vld [vmem:[%s0] sm:$0xff]
    %v35 = vld [vmem:[%s0 + $0x8] sm:$0xff]
    %v36 = vld [vmem:[%s1] sm:$0x1]
    %38 = vset.pattern.permute.xlu0 0
    %39 = vperm.xlu0 %38, %v34
    %v40 = vpop.permute.xlu0 %39
    %43 = vset.pattern.permute.xlu0 0
    %44 = vperm.xlu0 %43, %v35
    %v45 = vpop.permute.xlu0 %44
    %v48 = vlaneseq
    %v49 = vshrl.u32 %v48, 7
    %v50 = vsub.s32 0, %v49
    %v51 = vrot.slane %v36, %v50
    %v53 = vmul.f32 %v40, %v51
    %v54 = vmul.f32 %v45, %v51
    %v55 = vld [vmem:[%s2] sm:$0x1]
    %v57 = vlaneseq
    %v58 = vshrl.u32 %v57, 7
    %v59 = vsub.s32 0, %v58
    %v60 = vrot.slane %v55, %v59
    %v62 = vadd.f32 %v53, %v60
    %v63 = vadd.f32 %v54, %v60
    %v64 = vmax.f32 %v62, 0.0
    %v65 = vmax.f32 %v63, 0.0
    %v66 = vld [vmem:[#allocation2] sm:$0xff]
    %v67 = vld [vmem:[#allocation2 + $0x8] sm:$0xff]
    %v68 = vld [vmem:[#allocation2 + $0x10] sm:$0xff]
    %v69 = vld [vmem:[#allocation2 + $0x18] sm:$0xff]
    %v70 = vld [vmem:[#allocation2 + $0x20] sm:$0xff]
    %v71 = vld [vmem:[#allocation2 + $0x28] sm:$0xff]
    %v72 = vld [vmem:[#allocation2 + $0x30] sm:$0xff]
    %v73 = vld [vmem:[#allocation2 + $0x38] sm:$0xff]
    %v74 = vld [vmem:[#allocation2 + $0x40] sm:$0xff]
    %v75 = vld [vmem:[#allocation2 + $0x48] sm:$0xff]
    %v76 = vld [vmem:[#allocation2 + $0x50] sm:$0xff]
    %v77 = vld [vmem:[#allocation2 + $0x58] sm:$0xff]
    %v78 = vld [vmem:[#allocation2 + $0x60] sm:$0xff]
    %v79 = vld [vmem:[#allocation2 + $0x68] sm:$0xff]
    %v80 = vld [vmem:[#allocation2 + $0x70] sm:$0xff]
    %v81 = vld [vmem:[#allocation2 + $0x78] sm:$0xff]
    %v82 = vld [vmem:[%s4] sm:$0x1]
    %v84 = vlaneseq
    %v85 = vshrl.u32 %v84, 7
    %v86 = vsub.s32 0, %v85
    %v87 = vrot.slane %v82, %v86
    %89 = vmatprep.subr.mxu0 0.0
    %90 = vmatpush1.msra.mxu0 %v81
    %91 = vmatprep.subr.mxu0 0.0
    %92 = vmatpush1.msra.mxu0 %v80
    %93 = vmatprep.subr.mxu0 0.0
    %94 = vmatpush1.msra.mxu0 %v79
    %95 = vmatprep.subr.mxu0 0.0
    %96 = vmatpush1.msra.mxu0 %v78
    %97 = vmatprep.subr.mxu0 0.0
    %98 = vmatpush1.msra.mxu0 %v77
    %99 = vmatprep.subr.mxu0 0.0
    %100 = vmatpush1.msra.mxu0 %v76
    %101 = vmatprep.subr.mxu0 0.0
    %102 = vmatpush1.msra.mxu0 %v75
    %103 = vmatprep.subr.mxu0 0.0
    %104 = vmatpush1.msra.mxu0 %v74
    %105 = vmatprep.subr.mxu0 0.0
    %106 = vmatpush1.msra.mxu0 %v73
    %107 = vmatprep.subr.mxu0 0.0
    %108 = vmatpush1.msra.mxu0 %v72
    %109 = vmatprep.subr.mxu0 0.0
    %110 = vmatpush1.msra.mxu0 %v71
    %111 = vmatprep.subr.mxu0 0.0
    %112 = vmatpush1.msra.mxu0 %v70
    %113 = vmatprep.subr.mxu0 0.0
    %114 = vmatpush1.msra.mxu0 %v69
    %115 = vmatprep.subr.mxu0 0.0
    %116 = vmatpush1.msra.mxu0 %v68
    %117 = vmatprep.subr.mxu0 0.0
    %118 = vmatpush1.msra.mxu0 %v67
    %119 = vmatprep.subr.mxu0 0.0
    %120 = vmatpush1.msra.mxu0 %v66
    %121 = vmatprep.subr.mxu0 0.0
    %122 = vmatpush2.msra.mxu0 0.0
    %123 = vmatprep.subr.mxu0 0.0
    %124 = vmatpush2.msra.mxu0 0.0
    %125 = vmatprep.subr.mxu0 0.0
    %126 = vmatpush2.msra.mxu0 0.0
    %127 = vmatprep.subr.mxu0 0.0
    %128 = vmatpush2.msra.mxu0 0.0
    %129 = vmatprep.subr.mxu0 0.0
    %130 = vmatpush2.msra.mxu0 0.0
    %131 = vmatprep.subr.mxu0 0.0
    %132 = vmatpush2.msra.mxu0 0.0
    %133 = vmatprep.subr.mxu0 0.0
    %134 = vmatpush2.msra.mxu0 0.0
    %135 = vmatprep.subr.mxu0 0.0
    %136 = vmatpush2.msra.mxu0 0.0
    %137 = vmatprep.subr.mxu0 0.0
    %138 = vmatpush2.msra.mxu0 0.0
    %139 = vmatprep.subr.mxu0 0.0
    %140 = vmatpush2.msra.mxu0 0.0
    %141 = vmatprep.subr.mxu0 0.0
    %142 = vmatpush2.msra.mxu0 0.0
    %143 = vmatprep.subr.mxu0 0.0
    %144 = vmatpush2.msra.mxu0 0.0
    %145 = vmatprep.subr.mxu0 0.0
    %146 = vmatpush2.msra.mxu0 0.0
    %147 = vmatprep.subr.mxu0 0.0
    %148 = vmatpush2.msra.mxu0 0.0
    %149 = vmatprep.subr.mxu0 0.0
    %150 = vmatpush2.msra.mxu0 0.0
    %151 = vmatprep.subr.mxu0 0.0
    %152 = vmatpush2.msra.mxu0 0.0
    %153 = vmatprep.mubr.f32.mxu0 0.0
    %154 = vmatmul.mubr.f32.gmra.mxu0 %v64
    %v155 = vpop.f32.mrf.mxu0
    %v156 = vadd.f32 %v87, %v155
    %v157 = vpop.f32.mrf.mxu0
    %158 = vmatprep.mubr.f32.mxu0 0.0
    %159 = vmatmul.mubr.f32.gmra.mxu0 %v65
    %v160 = vpop.f32.mrf.mxu0
    %v161 = vadd.f32 %v87, %v160
    %v162 = vpop.f32.mrf.mxu0
    %163 = vdwg.mxu0
    %v164 = vlaneseq
    %v165 = vand.u32 %v164, 127
    %vm166 = vcmp.lt.s32.totalorder %v165, 10
    %v167 = vsel %vm166, %v156, -1e+30
    %v168 = vsel %vm166, %v161, -1e+30
    %169 = vmax.xlane.f32.xlu0 %v167
    %v170 = vpop.xlane.xlu0 %169
    %171 = vmax.xlane.f32.xlu0 %v168
    %v172 = vpop.xlane.xlu0 %171
    %v173 = vsub.f32 %v167, %v170
    %v174 = vsub.f32 %v168, %v172
    %v175 = vmul.f32 %v173, 1.442695
    %v176 = vpow.pop %v175
    %v177 = vmul.f32 %v174, 1.442695
    %v178 = vpow.pop %v177
    %179 = vadd.xlane.f32.xlu0 %v176
    %v180 = vpop.xlane.xlu0 %179
    %181 = vadd.xlane.f32.xlu0 %v178
    %v182 = vpop.xlane.xlu0 %181
    %v183 = vrcp.pop %v180
    %v184 = vrcp.pop %v182
    %v185 = vmul.f32 %v176, %v183
    %v186 = vmul.f32 %v178, %v184
    %v187 = vsel %vm166, %v185, %v156
    %v188 = vsel %vm166, %v186, %v161
    %189 = vst [vmem:[%s5] sm:$0xff] %v187
    %190 = vst [vmem:[%s5 + $0x8] sm:$0xff] %v188
    // Predicated region
    $region26: #{mfmaac_forward_core.1} parent=1 // pred_check
      _
    $region27: #{mfmaac_forward_core.1} parent=1 // pred_check_branch
      %192 = sbr.rel (0) target = $region29
    $region28: #{mfmaac_forward_core.1} parent=1 // pred_region
      _
    $region29: #{mfmaac_forward_core.1} parent=1 // pred_fallthru
      _
    // Predicated region
    $region30: #{mfmaac_forward_core.1} parent=1 // pred_check
      _
    $region31: #{mfmaac_forward_core.1} parent=1 // pred_check_branch
      %194 = sbr.rel (0) target = $region33
    $region32: #{mfmaac_forward_core.1} parent=1 // pred_region
      _
    $region33: #{mfmaac_forward_core.1} parent=1 // pred_fallthru
      _
    %195 = vsyncpa [#allocation3], 1

</llo_original>
